<compile_context>
chip_gen: v7x
topology: tpu7x:2x2x1
jax: 0.10.0
libtpu: 0.0.40
codegen_flags: <defaults>
</compile_context>

<pallas_src>
import jax
import jax.numpy as jnp
from jax.experimental import pallas as pl
from jax.experimental.pallas import tpu as pltpu


def _make_pad_kernel(h, w, ph, pw):
    def _pad_kernel(x_ref, o_ref):
        # x_ref: (C_BLK, h, w); o_ref: (C_BLK, h + ph, w + pw)
        c_blk = o_ref.shape[0]
        # 1) Copy the interior exactly once (this kernel is store-bound; avoid the
        #    redundant full-tile zero that doubled store traffic on the interior).
        o_ref[:, :h, :w] = x_ref[...]
        # 2) Zero only the pad strips.
        if ph > 0:
            o_ref[:, h:, :] = jnp.zeros((c_blk, ph, w + pw), o_ref.dtype)
        if pw > 0:
            o_ref[:, :h, w:] = jnp.zeros((c_blk, h, pw), o_ref.dtype)

    return _pad_kernel


def _largest_divisor_leq(n, cap):
    cap = max(1, min(int(cap), n))
    for d in range(cap, 0, -1):
        if n % d == 0:
            return d
    return 1


def pad_layer(x, pad_dims):
    """Pallas equivalent of PadLayer(pad_dims).forward(x) for NCHW inputs."""
    ph, pw = int(pad_dims[0]), int(pad_dims[1])
    if ph + pw == 0:
        return x

    n, c, h, w = x.shape
    out_h, out_w = h + ph, w + pw
    nc = n * c
    itemsize = jnp.dtype(x.dtype).itemsize

    # Channel-block selection: aim for a few-MiB per buffer to amortize per-grid-step
    # overhead, but keep >= 2 grid blocks when possible so both v7x TensorCores get work.
    target_bytes = 4 * 1024 * 1024
    per_slice_bytes = max(h * w, out_h * out_w) * itemsize
    cap = max(1, target_bytes // per_slice_bytes)
    if nc >= 2:
        cap = min(cap, max(1, nc // 2))
    c_blk = _largest_divisor_leq(nc, cap)
    grid = (nc // c_blk,)

    # Explicit VMEM budget: double-buffered input + output tiles with headroom,
    # kept well under v7x's 64 MiB physical VMEM.
    needed = 2 * c_blk * (h * w + out_h * out_w) * itemsize
    vmem_limit = int(min(48 * 1024 * 1024, max(2 * needed, 16 * 1024 * 1024)))

    x3 = x.reshape(nc, h, w)

    out3 = pl.pallas_call(
        _make_pad_kernel(h, w, ph, pw),
        out_shape=jax.ShapeDtypeStruct((nc, out_h, out_w), x.dtype),
        grid_spec=pltpu.PrefetchScalarGridSpec(
            num_scalar_prefetch=0,
            grid=grid,
            in_specs=[pl.BlockSpec((c_blk, h, w), lambda i: (i, 0, 0))],
            out_specs=pl.BlockSpec((c_blk, out_h, out_w), lambda i: (i, 0, 0)),
        ),
        compiler_params=pltpu.CompilerParams(
            dimension_semantics=("parallel",),
            vmem_limit_bytes=vmem_limit,
        ),
    )(x3)

    return out3.reshape(n, c, out_h, out_w)


if __name__ == "__main__":
    key = jax.random.PRNGKey(0)
    x = jax.random.normal(key, (2, 4, 16, 16), dtype=jnp.float32)

    # Main case: pad H by 3 (bottom), W by 5 (right).
    pad_dims = (3, 5)
    out = jax.block_until_ready(pad_layer(x, pad_dims))
    ref = jnp.pad(x, ((0, 0), (0, 0), (0, pad_dims[0]), (0, pad_dims[1])))
    assert out.shape == (2, 4, 19, 21), out.shape
    assert jnp.allclose(out, ref), "mismatch vs reference (both pads)"

    # H-only pad (exercises the pw == 0 branch) on an odd channel count.
    x2 = jax.random.normal(jax.random.PRNGKey(0), (1, 3, 8, 8), dtype=jnp.float32)
    out_h_only = jax.block_until_ready(pad_layer(x2, (2, 0)))
    assert jnp.allclose(out_h_only, jnp.pad(x2, ((0, 0), (0, 0), (0, 2), (0, 0)))), \
        "mismatch vs reference (H-only pad)"

    # W-only pad (exercises the ph == 0 branch).
    out_w_only = jax.block_until_ready(pad_layer(x2, (0, 4)))
    assert jnp.allclose(out_w_only, jnp.pad(x2, ((0, 0), (0, 0), (0, 0), (0, 4)))), \
        "mismatch vs reference (W-only pad)"

    # pad_dims == (0, 0) passthrough path.
    out0 = jax.block_until_ready(pad_layer(x, (0, 0)))
    assert jnp.array_equal(out0, x)

    print("KERNEL_OK")
</pallas_src>

<mosaic_0001>
module attributes {stable_mosaic.version = 11 : i64} {
  func.func @_pad_kernel(%arg0: i32, %arg1: memref<4x16x16xf32, #tpu.memory_space<vmem>>, %arg2: memref<4x19x21xf32, #tpu.memory_space<vmem>>) attributes {dimension_semantics = [#tpu.dimension_semantics<parallel>], iteration_bounds = array<i64: 2>, scalar_prefetch = 0 : i64, scratch_operands = 0 : i64, tpu.core_type = #tpu.core_type<tc>, window_params = [{transform_indices = @transform_0, window_bounds = array<i64: 4, 16, 16>}, {transform_indices = @transform_1, window_bounds = array<i64: 4, 19, 21>}]} {
    %c0 = arith.constant 0 : index
    %c0_0 = arith.constant 0 : index
    %c0_1 = arith.constant 0 : index
    %0 = vector.load %arg1[%c0, %c0_0, %c0_1] : memref<4x16x16xf32, #tpu.memory_space<vmem>>, vector<4x16x16xf32>
    %c0_2 = arith.constant 0 : index
    %c0_3 = arith.constant 0 : index
    %c0_4 = arith.constant 0 : index
    %1 = vector.load %arg2[%c0_2, %c0_3, %c0_4] : memref<4x19x21xf32, #tpu.memory_space<vmem>>, vector<4x16x16xf32>
    tpu.vector_store %arg2[%c0_2, %c0_3, %c0_4], %0 {strides = array<i32>} : memref<4x19x21xf32, #tpu.memory_space<vmem>>, vector<4x16x16xf32>,
    %cst = arith.constant 0.000000e+00 : f32
    %2 = vector.broadcast %cst : f32 to vector<4x3x21xf32>
    %c0_5 = arith.constant 0 : index
    %c16 = arith.constant 16 : index
    %c0_6 = arith.constant 0 : index
    %3 = vector.load %arg2[%c0_5, %c16, %c0_6] : memref<4x19x21xf32, #tpu.memory_space<vmem>>, vector<4x3x21xf32>
    tpu.vector_store %arg2[%c0_5, %c16, %c0_6], %2 {strides = array<i32>} : memref<4x19x21xf32, #tpu.memory_space<vmem>>, vector<4x3x21xf32>,
    %cst_7 = arith.constant 0.000000e+00 : f32
    %4 = vector.broadcast %cst_7 : f32 to vector<4x16x5xf32>
    %c0_8 = arith.constant 0 : index
    %c0_9 = arith.constant 0 : index
    %c16_10 = arith.constant 16 : index
    %5 = vector.load %arg2[%c0_8, %c0_9, %c16_10] : memref<4x19x21xf32, #tpu.memory_space<vmem>>, vector<4x16x5xf32>
    tpu.vector_store %arg2[%c0_8, %c0_9, %c16_10], %4 {strides = array<i32>} : memref<4x19x21xf32, #tpu.memory_space<vmem>>, vector<4x16x5xf32>,
    return
  }
  func.func @transform_0(%arg0: i32) -> (i32, i32, i32) {
    %c0_i32 = arith.constant 0 : i32
    %c0_i32_0 = arith.constant 0 : i32
    %c0_i32_1 = arith.constant 0 : i32
    return %arg0, %c0_i32, %c0_i32_0 : i32, i32, i32
  }
  func.func @transform_1(%arg0: i32) -> (i32, i32, i32) {
    %c0_i32 = arith.constant 0 : i32
    %c0_i32_0 = arith.constant 0 : i32
    %c0_i32_1 = arith.constant 0 : i32
    return %arg0, %c0_i32, %c0_i32_0 : i32, i32, i32
  }
}

</mosaic_0001>

<llo_original>
// kernel: tpu_custom_call.1
$region0: #{tpu_custom_call.1}
  #allocation0 [shape = 'u32[]', space=smem, size = 0x4, offset = 0x4, fixed_abs, tag = 'smem constant byte address 0x4 - core index']
  #allocation1 [shape = 'u32[144,128]{1,0:T(1,128)}', space=vmem, size = 0x12000, scoped, tag = 'internal scratch']
  %s0 = inlined_call_operand.hbm [shape: f32[8,16,16], index: 0, kind: input, shape index: {}]
  %s1 = inlined_call_operand.vmem [shape: f32[8,19,21], index: 1, kind: output, shape index: {}]
  %s2 = sld [smem:[#allocation0]]
  $region41: #{tpu_custom_call.1} parent=0
    _
  %s4 = ssub.s32 1, %s2
  %s5 = scalar_select 0, %s4, %s2
  $region1: #{tpu_custom_call.1} parent=0
    #allocation2 [shape = 'u8[65536]{0}', space=vmem, size = 0x10000, scoped, tag = 'input window, operand 0']
    #allocation3 [shape = 's32[2]{0}', space=sflag, size = 0x8, scoped, tag = 'scoped memory for tpu_custom_call.1']
    %6 = vsyncpa [#allocation3], 0
    %s7 = scalar_lea.sflag [#allocation3], 1
    %8 = vsyncpa %s7, 0
    loop: start=0, step=1, limit=4
    $region2: #{tpu_custom_call.1} parent=1 // loop_pre_header
      _
    $region3: #{tpu_custom_call.1} parent=1 // loop_header
      %s10 = sphi 0, %s14
      %p11 = scmp.ge.s32.totalorder %s10, 4
      %s20 = sphi 0, %s22
      %s23 = sphi 0, %s20
      %s24 = sphi 0, %s23
      %s40 = sphi 0, %s24
      %s46 = sphi 0, %s48
      %s49 = sphi 0, %s46
      %s50 = sphi 0, %s49
      %s66 = sphi 0, %s50
    $region4: #{tpu_custom_call.1} parent=1 // loop_header_branch
      %13 = sbr.rel (%p11) target = $region8
    $region5: #{tpu_custom_call.1} parent=1 // loop_body
      %s15 = ssub.s32 %s10, 1
      %s16 = ssub.s32 %s10, 2
      %s17 = sadd.s32 %s10, 1
      %s18 = ssub.s32 %s10, %s17
      %p19 = scmp.eq.s32.totalorder %s18, 0
      %s21 = sadd.s32 %s20, 1
      %s22 = scalar_select %p19, %s20, %s21
      %p25 = pneg %p19
      %p26 = scmp.eq.s32.totalorder %s10, 1
      %p27 = por %p25, %p26
      %p28 = scmp.ne.s32.totalorder %s20, %s23
      %p29 = scmp.eq.s32.totalorder %s10, 0
      %p30 = por %p28, %p29
      %p31 = scmp.ne.s32.totalorder %s20, %s23
      %p32 = scmp.eq.s32.totalorder %s15, 1
      %p33 = por %p31, %p32
      %p34 = scmp.ne.s32.totalorder %s23, %s24
      %p35 = scmp.eq.s32.totalorder %s15, 0
      %p36 = por %p34, %p35
      %p37 = scmp.ne.s32.totalorder %s23, %s24
      %p38 = scmp.eq.s32.totalorder %s16, 1
      %p39 = por %p37, %p38
      %p41 = scmp.ne.s32.totalorder %s24, %s40
      %p42 = scmp.eq.s32.totalorder %s16, 0
      %p43 = por %p41, %p42
      %s44 = ssub.s32 %s10, %s17
      %p45 = scmp.eq.s32.totalorder %s44, 0
      %s47 = sadd.s32 %s46, 1
      %s48 = scalar_select %p45, %s46, %s47
      %p51 = pneg %p45
      %p52 = scmp.eq.s32.totalorder %s10, 1
      %p53 = por %p51, %p52
      %p54 = scmp.ne.s32.totalorder %s46, %s49
      %p55 = scmp.eq.s32.totalorder %s10, 0
      %p56 = por %p54, %p55
      %p57 = scmp.ne.s32.totalorder %s46, %s49
      %p58 = scmp.eq.s32.totalorder %s15, 1
      %p59 = por %p57, %p58
      %p60 = scmp.ne.s32.totalorder %s49, %s50
      %p61 = scmp.eq.s32.totalorder %s15, 0
      %p62 = por %p60, %p61
      %p63 = scmp.ne.s32.totalorder %s49, %s50
      %p64 = scmp.eq.s32.totalorder %s16, 1
      %p65 = por %p63, %p64
      %p67 = scmp.ne.s32.totalorder %s50, %s66
      %p68 = scmp.eq.s32.totalorder %s16, 0
      %p69 = por %p67, %p68
      %p70 = scmp.le.s32.totalorder 1, %s10
      %p71 = scmp.lt.s32.totalorder %s10, 3
      %p72 = pnand %p70, %p71
      %p73 = pneg %p72
      // Predicated region
      $region9: #{tpu_custom_call.1} parent=5 // pred_check
        _
      $region10: #{tpu_custom_call.1} parent=5 // pred_check_branch
        %75 = sbr.rel (%p72) target = $region12
      $region11: #{tpu_custom_call.1} parent=5 // pred_region
        %s76 = ssub.s32 %s10, 1
      $region12: #{tpu_custom_call.1} parent=5 // pred_fallthru
        _
      %p77 = scmp.lt.s32.totalorder %s10, 2
      // Predicated region
      $region13: #{tpu_custom_call.1} parent=5 // pred_check
        %p78 = pneg %p77
      $region14: #{tpu_custom_call.1} parent=5 // pred_check_branch
        %80 = sbr.rel (%p78) target = $region16
      $region15: #{tpu_custom_call.1} parent=5 // pred_region
        // Predicated region
        $region17: #{tpu_custom_call.1} parent=15 // pred_check
          %p81 = pneg %p30
        $region18: #{tpu_custom_call.1} parent=15 // pred_check_branch
          %83 = sbr.rel (%p81) target = $region20
        $region19: #{tpu_custom_call.1} parent=15 // pred_region
          %s84 = sand.u32 %s20, 1
          %s85 = scalar_lea.sflag [#allocation3], %s84
          %s86 = sand.u32 %s20, 1
          %s87 = smul.addr %s86, 64
          %s88 = scalar_lea.vmem [#allocation2], %s87
          %s89 = smul.u32 4, %s10
          %s91 = ssub.s32 1024, 1024
          %92 = vsyncadd %s85, %s91
          %s93 = smul.addr %s89, 2
          %s94 = smul.addr %s93, 128
          %s95 = scalar_lea.hbm %s0, %s94
          %s96 = sshll.u32 %s88, 4
          %s97 = int_to_ptr.vmem [resolvable:$true] %s96
          %102 = dma.hbm_to_vmem [thread:$0]  %s95, 1024, %s97, %s85, 128, 128, 8
        $region20: #{tpu_custom_call.1} parent=15 // pred_fallthru
          _
      $region16: #{tpu_custom_call.1} parent=5 // pred_fallthru
        _
      %p103 = scmp.le.s32.totalorder 1, %s10
      %p104 = scmp.lt.s32.totalorder %s10, 3
      %p105 = pnand %p103, %p104
      %p106 = pneg %p105
      // Predicated region
      $region21: #{tpu_custom_call.1} parent=5 // pred_check
        _
      $region22: #{tpu_custom_call.1} parent=5 // pred_check_branch
        %108 = sbr.rel (%p105) target = $region24
      $region23: #{tpu_custom_call.1} parent=5 // pred_region
        %s109 = ssub.s32 %s10, 1
        %s110 = sand.u32 %s23, 1
        %s111 = scalar_lea.sflag [#allocation3], %s110
        %s112 = sand.u32 %s23, 1
        %s113 = smul.addr %s112, 64
        %s114 = scalar_lea.vmem [#allocation2], %s113
        // Predicated region
        $region25: #{tpu_custom_call.1} parent=23 // pred_check
          %p115 = pneg %p36
        $region26: #{tpu_custom_call.1} parent=23 // pred_check_branch
          %117 = sbr.rel (%p115) target = $region28
        $region27: #{tpu_custom_call.1} parent=23 // pred_region
          %118 = dma.done %s111, 1024
        $region28: #{tpu_custom_call.1} parent=23 // pred_fallthru
          _
        %s119 = sand.u32 %s23, 1
        %s120 = scalar_lea.sflag [#allocation3], %s119
        %s121 = sand.u32 %s23, 1
        %s122 = smul.addr %s121, 64
        %s123 = scalar_lea.vmem [#allocation2], %s122
        %p124 = pneg %p36
        %p125 = pneg %p33
        %p126 = pneg %p62
        %p127 = pneg %p59
        %s128 = smul.u32 4, %s15
        %p129 = scmp.lt.s32.totalorder %s128, 7
        %s130 = scalar_select %p129, %s128, 7
        %s131 = smul.addr %s130, 3
        %s132 = smul.addr %s131, 8
        %s133 = scalar_lea.vmem %s1, %s132
        %s134 = smul.u32 4, %s15
        %s135 = smul.u32 4, %s15
        %p136 = scmp.lt.s32.totalorder %s135, 7
        %s137 = scalar_select %p136, %s135, 7
        %s138 = smul.addr %s137, 3
        %s139 = smul.addr %s138, 8
        %s140 = scalar_lea.vmem %s1, %s139
        %s141 = smul.u32 4, %s15
        %v142 = vld [vmem:[%s114] sm:$0xff]
        %v143 = vld [vmem:[%s114 + $0x8] sm:$0xff]
        %v144 = vld [vmem:[%s114 + $0x10] sm:$0xff]
        %v145 = vld [vmem:[%s114 + $0x18] sm:$0xff]
        %v146 = vld [vmem:[%s114 + $0x20] sm:$0xff]
        %v147 = vld [vmem:[%s114 + $0x28] sm:$0xff]
        %v148 = vld [vmem:[%s114 + $0x30] sm:$0xff]
        %v149 = vld [vmem:[%s114 + $0x38] sm:$0xff]
        %vm150 = vcmask 130048
        %151 = vst.msk [vmem:[%s140] sm:$0xff] %vm150, %v142
        %152 = vst.msk [vmem:[%s140 + $0x8] sm:$0xff] %vm150, %v143
        %153 = vst.msk [vmem:[%s140 + $0x18] sm:$0xff] %vm150, %v144
        %154 = vst.msk [vmem:[%s140 + $0x20] sm:$0xff] %vm150, %v145
        %155 = vst.msk [vmem:[%s140 + $0x30] sm:$0xff] %vm150, %v146
        %156 = vst.msk [vmem:[%s140 + $0x38] sm:$0xff] %vm150, %v147
        %157 = vst.msk [vmem:[%s140 + $0x48] sm:$0xff] %vm150, %v148
        %158 = vst.msk [vmem:[%s140 + $0x50] sm:$0xff] %vm150, %v149
        %vm159 = vcmask 165888
        %160 = vst.msk [vmem:[%s140 + $0x10] sm:$0x7] %vm159, 0.0
        %161 = vst.msk [vmem:[%s140 + $0x28] sm:$0x7] %vm159, 0.0
        %162 = vst.msk [vmem:[%s140 + $0x40] sm:$0x7] %vm159, 0.0
        %163 = vst.msk [vmem:[%s140 + $0x58] sm:$0x7] %vm159, 0.0
        %vm164 = vcmask 171136
        %165 = vst.msk [vmem:[%s140] sm:$0xff] %vm164, 0.0
        %166 = vst.msk [vmem:[%s140 + $0x8] sm:$0xff] %vm164, 0.0
        %167 = vst.msk [vmem:[%s140 + $0x18] sm:$0xff] %vm164, 0.0
        %168 = vst.msk [vmem:[%s140 + $0x20] sm:$0xff] %vm164, 0.0
        %169 = vst.msk [vmem:[%s140 + $0x30] sm:$0xff] %vm164, 0.0
        %170 = vst.msk [vmem:[%s140 + $0x38] sm:$0xff] %vm164, 0.0
        %171 = vst.msk [vmem:[%s140 + $0x48] sm:$0xff] %vm164, 0.0
        %172 = vst.msk [vmem:[%s140 + $0x50] sm:$0xff] %vm164, 0.0
        %s173 = smul.u32 4, %s15
        %p174 = scmp.lt.s32.totalorder %s173, 7
        %s175 = scalar_select %p174, %s173, 7
        %s176 = smul.addr %s175, 3
        %s177 = smul.addr %s176, 8
        %s178 = scalar_lea.vmem %s1, %s177
        // Predicated region
        $region29: #{tpu_custom_call.1} parent=23 // pred_check
          %p179 = pneg %p59
        $region30: #{tpu_custom_call.1} parent=23 // pred_check_branch
          %181 = sbr.rel (%p179) target = $region32
        $region31: #{tpu_custom_call.1} parent=23 // pred_region
          %s182 = smul.u32 4, %s15
        $region32: #{tpu_custom_call.1} parent=23 // pred_fallthru
          _
      $region24: #{tpu_custom_call.1} parent=5 // pred_fallthru
        _
      %p183 = scmp.le.s32.totalorder 2, %s10
      // Predicated region
      $region33: #{tpu_custom_call.1} parent=5 // pred_check
        %p184 = pneg %p183
      $region34: #{tpu_custom_call.1} parent=5 // pred_check_branch
        %186 = sbr.rel (%p184) target = $region36
      $region35: #{tpu_custom_call.1} parent=5 // pred_region
        %s187 = ssub.s32 %s10, 2
        // Predicated region
        $region37: #{tpu_custom_call.1} parent=35 // pred_check
          %p188 = pneg %p65
        $region38: #{tpu_custom_call.1} parent=35 // pred_check_branch
          %190 = sbr.rel (%p188) target = $region40
        $region39: #{tpu_custom_call.1} parent=35 // pred_region
          %s191 = smul.u32 4, %s16
          %p192 = scmp.lt.s32.totalorder %s191, 7
          %s193 = scalar_select %p192, %s191, 7
          %s194 = smul.addr %s193, 3
          %s195 = smul.addr %s194, 8
          %s196 = scalar_lea.vmem %s1, %s195
        $region40: #{tpu_custom_call.1} parent=35 // pred_fallthru
          _
      $region36: #{tpu_custom_call.1} parent=5 // pred_fallthru
        _
    $region6: #{tpu_custom_call.1} parent=1 // loop_footer
      %s14 = sadd.s32 1, %s10
    $region7: #{tpu_custom_call.1} parent=1 // loop_footer_branch
      %9 = sbr.rel target = $region3
    $region8: #{tpu_custom_call.1} parent=1 // loop_exit
      _
    %197 = vsyncpa [#allocation3], 1
    %s198 = scalar_lea.sflag [#allocation3], 1
    %199 = vsyncpa %s198, 1

</llo_original>
